<compile_context>
chip_gen: v7x
topology: tpu7x:2x2x1
jax: 0.10.0
libtpu: 0.0.40
codegen_flags: <defaults>
</compile_context>

<pallas_src>
import functools

import jax
import jax.numpy as jnp
from jax.experimental import pallas as pl
from jax.experimental.pallas import tpu as pltpu


def _add_kernel(a_ref, b_ref, o_ref):
    o_ref[...] = a_ref[...] + b_ref[...]


def _sublane_packing(dtype) -> int:
    """Sublane packing factor: rows must be a multiple of this for dense vregs."""
    itemsize = jnp.dtype(dtype).itemsize
    return {4: 8, 2: 16, 1: 32}.get(itemsize, 8)


# Working-set threshold below which a single grid-less block is always best.
_SMALL_BYTES = 2 * 1024 * 1024


def _small_add(a_flat, b_flat, total, dtype, itemsize):
    """Single-block (grid-less) lane-dense add for small working sets."""
    rows = _sublane_packing(dtype)
    padded = pl.cdiv(total, rows) * rows
    pad = padded - total
    if pad:
        a_flat = jnp.pad(a_flat, (0, pad))
        b_flat = jnp.pad(b_flat, (0, pad))
    cols = padded // rows
    a2d = a_flat.reshape(rows, cols)
    b2d = b_flat.reshape(rows, cols)

    cost = pl.CostEstimate(
        flops=total, transcendentals=0, bytes_accessed=3 * total * itemsize
    )
    # Alias only when the reshape is a pure bitcast of the donated argument;
    # with padding the operand is a fresh intermediate and aliasing buys nothing.
    aliases = {0: 0} if pad == 0 else {}

    out2d = pl.pallas_call(
        _add_kernel,
        out_shape=jax.ShapeDtypeStruct((rows, cols), dtype),
        in_specs=[
            pl.BlockSpec((rows, cols), lambda: (0, 0)),
            pl.BlockSpec((rows, cols), lambda: (0, 0)),
        ],
        out_specs=pl.BlockSpec((rows, cols), lambda: (0, 0)),
        input_output_aliases=aliases,
        cost_estimate=cost,
        compiler_params=pltpu.CompilerParams(
            # Allow XLA to fuse x133's elementwise producer into operand 1.
            allow_input_fusion=[False, True],
        ),
    )(a2d, b2d)

    out_flat = out2d.reshape(-1)
    if pad:
        out_flat = out_flat[:total]
    return out_flat


def _tiled_add(a_flat, b_flat, total, dtype, itemsize):
    """Gridded row tiling for large tensors: >=512-lane blocks, parallel axis."""
    packing = _sublane_packing(dtype)
    lanes = 512                       # multiple of 128, >=512 for HBM roofline
    block_rows = 32 * packing         # f32: (256, 512) = 512 KiB / operand / block
    block_elems = block_rows * lanes
    padded = pl.cdiv(total, block_elems) * block_elems
    pad = padded - total
    if pad:
        a_flat = jnp.pad(a_flat, (0, pad))
        b_flat = jnp.pad(b_flat, (0, pad))
    rows = padded // lanes
    a2d = a_flat.reshape(rows, lanes)
    b2d = b_flat.reshape(rows, lanes)

    cost = pl.CostEstimate(
        flops=total, transcendentals=0, bytes_accessed=3 * total * itemsize
    )
    aliases = {0: 0} if pad == 0 else {}

    out2d = pl.pallas_call(
        _add_kernel,
        out_shape=jax.ShapeDtypeStruct((rows, lanes), dtype),
        grid=(rows // block_rows,),
        in_specs=[
            pl.BlockSpec((block_rows, lanes), lambda i: (i, 0)),
            pl.BlockSpec((block_rows, lanes), lambda i: (i, 0)),
        ],
        out_specs=pl.BlockSpec((block_rows, lanes), lambda i: (i, 0)),
        input_output_aliases=aliases,
        cost_estimate=cost,
        compiler_params=pltpu.CompilerParams(
            dimension_semantics=("parallel",),
            allow_input_fusion=[False, True],
        ),
    )(a2d, b2d)

    out_flat = out2d.reshape(-1)
    if pad:
        out_flat = out_flat[:total]
    return out_flat


@functools.partial(jax.jit, donate_argnums=(0,))
def residual_add(x148: jax.Array, x133: jax.Array) -> jax.Array:
    """Elementwise add of two same-shape tensors via a Pallas TPU kernel."""
    assert x148.shape == x133.shape, "shapes must match for elementwise add"
    assert x148.dtype == x133.dtype, "dtypes must match for elementwise add"
    shape = x148.shape
    dtype = x148.dtype
    itemsize = jnp.dtype(dtype).itemsize

    total = 1
    for d in shape:
        total *= int(d)

    a_flat = x148.reshape(-1)
    b_flat = x133.reshape(-1)

    if 3 * total * itemsize <= _SMALL_BYTES:
        out_flat = _small_add(a_flat, b_flat, total, dtype, itemsize)
    else:
        out_flat = _tiled_add(a_flat, b_flat, total, dtype, itemsize)

    return out_flat.reshape(shape)


if __name__ == "__main__":
    key = jax.random.PRNGKey(0)
    k1, k2 = jax.random.split(key)

    # Shape from the module's forward: [1, 80, 14, 14]
    shape = (1, 80, 14, 14)
    x148 = jax.random.normal(k1, shape, dtype=jnp.float32)
    x133 = jax.random.normal(k2, shape, dtype=jnp.float32)

    # Compute the reference BEFORE the call: x148 is donated to the kernel.
    ref = x148 + x133

    out = residual_add(x148, x133)
    out = jax.block_until_ready(out)

    assert out.shape == shape
    assert jnp.allclose(out, ref, atol=1e-6, rtol=1e-6), "mismatch vs reference"

    print("KERNEL_OK")
</pallas_src>

<mosaic_0001>
module attributes {stable_mosaic.version = 11 : i64} {
  func.func @_add_kernel(%arg0: memref<8x1960xf32, #tpu.memory_space<vmem>>, %arg1: memref<8x1960xf32, #tpu.memory_space<vmem>>, %arg2: memref<8x1960xf32, #tpu.memory_space<vmem>>) attributes {dimension_semantics = [], scalar_prefetch = 0 : i64, scratch_operands = 0 : i64, tpu.core_type = #tpu.core_type<tc>} {
    %c0 = arith.constant 0 : index
    %c0_0 = arith.constant 0 : index
    %0 = vector.load %arg0[%c0, %c0_0] : memref<8x1960xf32, #tpu.memory_space<vmem>>, vector<8x1960xf32>
    %c0_1 = arith.constant 0 : index
    %c0_2 = arith.constant 0 : index
    %1 = vector.load %arg1[%c0_1, %c0_2] : memref<8x1960xf32, #tpu.memory_space<vmem>>, vector<8x1960xf32>
    %2 = arith.addf %0, %1 : vector<8x1960xf32>
    %c0_3 = arith.constant 0 : index
    %c0_4 = arith.constant 0 : index
    %3 = vector.load %arg2[%c0_3, %c0_4] : memref<8x1960xf32, #tpu.memory_space<vmem>>, vector<8x1960xf32>
    tpu.vector_store %arg2[%c0_3, %c0_4], %2 {strides = array<i32>} : memref<8x1960xf32, #tpu.memory_space<vmem>>, vector<8x1960xf32>,
    return
  }
}

</mosaic_0001>

<llo_original>
// kernel: residual_add.1
$region0: #{residual_add.1}
  #allocation0 [shape = 'u32[]', space=smem, size = 0x4, offset = 0x4, fixed_abs, tag = 'smem constant byte address 0x4 - core index']
  #allocation1 [shape = 'u32[144,128]{1,0:T(1,128)}', space=vmem, size = 0x12000, scoped, tag = 'internal scratch']
  %s0 = inlined_call_operand.vmem [shape: f32[8,1960], index: 0, kind: input, shape index: {}, may-alias: {0,2}]
  %s1 = inlined_call_operand.vmem [shape: f32[8,1960], index: 1, kind: input, shape index: {}]
  %s2 = inlined_call_operand.vmem [shape: f32[8,1960], index: 2, kind: output, shape index: {}, may-alias: {0,2}]
  %s3 = sld [smem:[#allocation0]]
  $region18: #{residual_add.1} parent=0
    _
  %s5 = ssub.s32 1, %s3
  %s6 = scalar_select 0, %s5, %s3
  // Predicated region
  $region2: #{residual_add.1} parent=0 // pred_check
    _
  $region3: #{residual_add.1} parent=0 // pred_check_branch
    %8 = sbr.rel (0) target = $region5
  $region4: #{residual_add.1} parent=0 // pred_region
    _
  $region5: #{residual_add.1} parent=0 // pred_fallthru
    _
  // Predicated region
  $region6: #{residual_add.1} parent=0 // pred_check
    _
  $region7: #{residual_add.1} parent=0 // pred_check_branch
    %10 = sbr.rel (0) target = $region9
  $region8: #{residual_add.1} parent=0 // pred_region
    _
  $region9: #{residual_add.1} parent=0 // pred_fallthru
    _
  %v11 = vld [vmem:[%s0] sm:$0xff]
  %v12 = vld [vmem:[%s0 + $0x8] sm:$0xff]
  %v13 = vld [vmem:[%s0 + $0x10] sm:$0xff]
  %v14 = vld [vmem:[%s0 + $0x18] sm:$0xff]
  %v15 = vld [vmem:[%s0 + $0x20] sm:$0xff]
  %v16 = vld [vmem:[%s0 + $0x28] sm:$0xff]
  %v17 = vld [vmem:[%s0 + $0x30] sm:$0xff]
  %v18 = vld [vmem:[%s0 + $0x38] sm:$0xff]
  %v19 = vld [vmem:[%s0 + $0x40] sm:$0xff]
  %v20 = vld [vmem:[%s0 + $0x48] sm:$0xff]
  %v21 = vld [vmem:[%s0 + $0x50] sm:$0xff]
  %v22 = vld [vmem:[%s0 + $0x58] sm:$0xff]
  %v23 = vld [vmem:[%s0 + $0x60] sm:$0xff]
  %v24 = vld [vmem:[%s0 + $0x68] sm:$0xff]
  %v25 = vld [vmem:[%s0 + $0x70] sm:$0xff]
  %v26 = vld [vmem:[%s0 + $0x78] sm:$0xff]
  %v27 = vld [vmem:[%s1] sm:$0xff]
  %v28 = vld [vmem:[%s1 + $0x8] sm:$0xff]
  %v29 = vld [vmem:[%s1 + $0x10] sm:$0xff]
  %v30 = vld [vmem:[%s1 + $0x18] sm:$0xff]
  %v31 = vld [vmem:[%s1 + $0x20] sm:$0xff]
  %v32 = vld [vmem:[%s1 + $0x28] sm:$0xff]
  %v33 = vld [vmem:[%s1 + $0x30] sm:$0xff]
  %v34 = vld [vmem:[%s1 + $0x38] sm:$0xff]
  %v35 = vld [vmem:[%s1 + $0x40] sm:$0xff]
  %v36 = vld [vmem:[%s1 + $0x48] sm:$0xff]
  %v37 = vld [vmem:[%s1 + $0x50] sm:$0xff]
  %v38 = vld [vmem:[%s1 + $0x58] sm:$0xff]
  %v39 = vld [vmem:[%s1 + $0x60] sm:$0xff]
  %v40 = vld [vmem:[%s1 + $0x68] sm:$0xff]
  %v41 = vld [vmem:[%s1 + $0x70] sm:$0xff]
  %v42 = vld [vmem:[%s1 + $0x78] sm:$0xff]
  %v43 = vadd.f32 %v11, %v27
  %v44 = vadd.f32 %v12, %v28
  %v45 = vadd.f32 %v13, %v29
  %v46 = vadd.f32 %v14, %v30
  %v47 = vadd.f32 %v15, %v31
  %v48 = vadd.f32 %v16, %v32
  %v49 = vadd.f32 %v17, %v33
  %v50 = vadd.f32 %v18, %v34
  %v51 = vadd.f32 %v19, %v35
  %v52 = vadd.f32 %v20, %v36
  %v53 = vadd.f32 %v21, %v37
  %v54 = vadd.f32 %v22, %v38
  %v55 = vadd.f32 %v23, %v39
  %v56 = vadd.f32 %v24, %v40
  %v57 = vadd.f32 %v25, %v41
  %v58 = vadd.f32 %v26, %v42
  %59 = vst [vmem:[%s2] sm:$0xff] %v43
  %60 = vst [vmem:[%s2 + $0x8] sm:$0xff] %v44
  %61 = vst [vmem:[%s2 + $0x10] sm:$0xff] %v45
  %62 = vst [vmem:[%s2 + $0x18] sm:$0xff] %v46
  %63 = vst [vmem:[%s2 + $0x20] sm:$0xff] %v47
  %64 = vst [vmem:[%s2 + $0x28] sm:$0xff] %v48
  %65 = vst [vmem:[%s2 + $0x30] sm:$0xff] %v49
  %66 = vst [vmem:[%s2 + $0x38] sm:$0xff] %v50
  %67 = vst [vmem:[%s2 + $0x40] sm:$0xff] %v51
  %68 = vst [vmem:[%s2 + $0x48] sm:$0xff] %v52
  %69 = vst [vmem:[%s2 + $0x50] sm:$0xff] %v53
  %70 = vst [vmem:[%s2 + $0x58] sm:$0xff] %v54
  %71 = vst [vmem:[%s2 + $0x60] sm:$0xff] %v55
  %72 = vst [vmem:[%s2 + $0x68] sm:$0xff] %v56
  %73 = vst [vmem:[%s2 + $0x70] sm:$0xff] %v57
  %vm74 = vcmask 326656
  %75 = vst.msk [vmem:[%s2 + $0x78] sm:$0xff] %vm74, %v58
  // Predicated region
  $region10: #{residual_add.1} parent=0 // pred_check
    _
  $region11: #{residual_add.1} parent=0 // pred_check_branch
    %77 = sbr.rel (0) target = $region13
  $region12: #{residual_add.1} parent=0 // pred_region
    _
  $region13: #{residual_add.1} parent=0 // pred_fallthru
    _
  // Predicated region
  $region14: #{residual_add.1} parent=0 // pred_check
    _
  $region15: #{residual_add.1} parent=0 // pred_check_branch
    %79 = sbr.rel (0) target = $region17
  $region16: #{residual_add.1} parent=0 // pred_region
    _
  $region17: #{residual_add.1} parent=0 // pred_fallthru
    _

</llo_original>
